<compile_context>
chip_gen: v7x
topology: tpu7x:2x2x1
jax: 0.10.0
libtpu: 0.0.40
codegen_flags: <defaults>
</compile_context>

<pallas_src>
import math
import numpy as np
import jax
import jax.numpy as jnp
from jax.experimental import pallas as pl
from jax.experimental.pallas import tpu as pltpu  # noqa: F401  (kept for CompilerParams if re-tiled)

# ----- module hyper-parameters (small synthetic sizes, same structure as the torch module) -----
IN_FEATURE = 128
OUT_FEATURE = 256
E = 1e-5
M = 0.5
EASY_MARGIN = False

COS_M = math.cos(M)
SIN_M = math.sin(M)
TH = math.cos(math.pi - M)
MM = math.sin(math.pi - M) * M
S1 = 1.0 / math.cos(M) * (math.log(OUT_FEATURE - 1) + math.log(1 - E) - math.log(E))

# Cast MXU operands to bf16 (native rate on v6e/v7x).  Off by default to keep exact f32
# parity with the torch reference (a ~1e-3 cosine shift interacts with the hard margin
# threshold); flip on after validating tolerances.
USE_BF16_MXU = False

_EPS_SQ = 1e-24  # rsqrt(max(||v||^2, eps^2)) == 1 / max(||v||, 1e-12), matching F.normalize


def mixface_fused_kernel(labels_ref, x_ref, wt_ref, out_ref, sim_ref):
    # labels_ref: (B, 1) int32 | x_ref: (B, D) | wt_ref: (D, C) pre-transposed weight
    # out_ref:    (B, C) margin logits      | sim_ref: (B, B) similarity of normalized x
    x = x_ref[...].astype(jnp.float32)

    # Normalize x once (row-wise); reused by both matmuls.
    inv_xn = jax.lax.rsqrt(jnp.maximum(jnp.sum(x * x, axis=-1, keepdims=True), _EPS_SQ))
    xn = x * inv_xn                                                      # (B, D)

    w = wt_ref[...].astype(jnp.float32)                                  # (D, C)
    # Per-class inverse norms: scale the (B, C) matmul RESULT instead of elementwise
    # normalizing the (D, C) weight tile.
    inv_wn = jax.lax.rsqrt(
        jnp.maximum(jnp.sum(w * w, axis=0, keepdims=True), _EPS_SQ))     # (1, C)

    if USE_BF16_MXU:
        lhs, rhs = xn.astype(jnp.bfloat16), w.astype(jnp.bfloat16)
    else:
        lhs, rhs = xn, w
    raw = jnp.dot(lhs, rhs, preferred_element_type=jnp.float32)          # (B, C)
    cosine = raw * inv_wn

    # Margin epilogue kept in f32 (v5e VPU/EUP have no bf16 elementwise).
    sine = jnp.sqrt(jnp.maximum(1.0 - cosine * cosine, 0.0))
    phi = cosine * COS_M - sine * SIN_M
    if EASY_MARGIN:
        phi = jnp.where(cosine > 0.0, phi, cosine)
    else:
        phi = jnp.where(cosine - TH > 0.0, phi, cosine - MM)

    B, C = out_ref.shape
    class_ids = jax.lax.broadcasted_iota(jnp.int32, (B, C), 1)
    is_target = class_ids == labels_ref[...]                             # scatter_(1, labels, 1)
    out_ref[...] = (jnp.where(is_target, phi, cosine) * S1).astype(out_ref.dtype)

    # Pairwise similarity of normalized features; contract on the last dim of both
    # operands so no in-kernel transpose is needed.
    sim_ref[...] = jax.lax.dot_general(
        xn, xn, dimension_numbers=(((1,), (1,)), ((), ())),
        preferred_element_type=jnp.float32,
    ).astype(sim_ref.dtype)


def mixface_margin_and_similarity(x, weight, labels):
    B, D = x.shape
    C, _ = weight.shape
    labels2d = labels.reshape(B, 1).astype(jnp.int32)
    wt = jnp.transpose(weight)                                           # (D, C): MXU-natural (K, N)
    return pl.pallas_call(
        mixface_fused_kernel,
        out_shape=(
            jax.ShapeDtypeStruct((B, C), jnp.float32),
            jax.ShapeDtypeStruct((B, B), jnp.float32),
        ),
        grid=(1,),
        in_specs=[
            pl.BlockSpec((B, 1), lambda i: (0, 0)),     # labels
            pl.BlockSpec((B, D), lambda i: (0, 0)),     # x
            pl.BlockSpec((D, C), lambda i: (0, 0)),     # weight.T
        ],
        out_specs=(
            pl.BlockSpec((B, C), lambda i: (0, 0)),     # margin logits (lane-dense, C=256)
            # (B, B)=8x8 block equals the full array so it is legal; the masked partial
            # store is negligible at B=8 (per perf review).
            pl.BlockSpec((B, B), lambda i: (0, 0)),
        ),
    )(labels2d, x, wt)


def mixface_forward(x, weight, labels):
    output, sim = mixface_margin_and_similarity(x, weight, labels)

    # TODO(synk): sp/sn extraction via boolean masking has data-dependent output shapes;
    # the index sets are derived on host from the tiny labels array only (no sync of the
    # large device tensors) and the gathers / pair construction run on device.
    lab_np = np.asarray(labels)
    label_matrix = lab_np[:, None] == lab_np[None, :]
    pos_r, pos_c = np.nonzero(np.triu(label_matrix, 1))
    neg_r, neg_c = np.nonzero(np.triu(~label_matrix, 1))

    sp = sim[pos_r, pos_c]                                 # (P,) device gather
    sn = sim[neg_r, neg_c]                                 # (N,) device gather
    num_sp = sp.shape[0]
    num_sn = sn.shape[0]
    s2 = math.log(num_sn) + math.log(1 - E) - math.log(E)
    output_pair = jnp.concatenate(
        [sp[:, None], jnp.broadcast_to(sn[None, :], (num_sp, num_sn))], axis=1
    ) * jnp.float32(s2)                                    # (P, 1 + N)
    re_labels = jnp.zeros((num_sp,), dtype=jnp.int32)      # torch .long(); int32 under JAX x32

    return output, output_pair, re_labels


if __name__ == "__main__":
    key = jax.random.PRNGKey(0)
    kx, kw = jax.random.split(key)

    B = 8
    x = jax.random.normal(kx, (B, IN_FEATURE), dtype=jnp.float32)

    # Deterministic xavier_uniform_-style init for weight (out_feature, in_feature)
    bound = math.sqrt(6.0 / (OUT_FEATURE + IN_FEATURE))
    weight = jax.random.uniform(
        kw, (OUT_FEATURE, IN_FEATURE), minval=-bound, maxval=bound, dtype=jnp.float32
    )

    # labels with repeats so the positive-pair set is non-empty
    labels = jnp.array([0, 1, 0, 2, 1, 3, 2, 0], dtype=jnp.int32)

    output, output_pair, re_labels = mixface_forward(x, weight, labels)
    output = jax.block_until_ready(output)
    output_pair = jax.block_until_ready(output_pair)
    re_labels = jax.block_until_ready(re_labels)

    assert output.shape == (B, OUT_FEATURE)
    assert bool(jnp.all(jnp.isfinite(output)))
    assert output_pair.ndim == 2 and output_pair.shape[0] == re_labels.shape[0]
    print("KERNEL_OK")
</pallas_src>

<mosaic_0001>
module attributes {stable_mosaic.version = 11 : i64} {
  func.func @mixface_fused_kernel(%arg0: i32, %arg1: memref<8x1xi32, #tpu.memory_space<vmem>>, %arg2: memref<8x128xf32, #tpu.memory_space<vmem>>, %arg3: memref<128x256xf32, #tpu.memory_space<vmem>>, %arg4: memref<8x256xf32, #tpu.memory_space<vmem>>, %arg5: memref<8x8xf32, #tpu.memory_space<vmem>>) attributes {dimension_semantics = [#tpu.dimension_semantics<arbitrary>], iteration_bounds = array<i64: 1>, scalar_prefetch = 0 : i64, scratch_operands = 0 : i64, tpu.core_type = #tpu.core_type<tc>, window_params = [{pipeline_mode = #tpu.pipeline_mode<synchronous>, transform_indices = @transform_0, window_bounds = array<i64: 8, 1>}, {pipeline_mode = #tpu.pipeline_mode<synchronous>, transform_indices = @transform_1, window_bounds = array<i64: 8, 128>}, {pipeline_mode = #tpu.pipeline_mode<synchronous>, transform_indices = @transform_2, window_bounds = array<i64: 128, 256>}, {pipeline_mode = #tpu.pipeline_mode<synchronous>, transform_indices = @transform_3, window_bounds = array<i64: 8, 256>}, {pipeline_mode = #tpu.pipeline_mode<synchronous>, transform_indices = @transform_4, window_bounds = array<i64: 8, 8>}]} {
    %c0 = arith.constant 0 : index
    %c0_0 = arith.constant 0 : index
    %0 = vector.load %arg2[%c0, %c0_0] : memref<8x128xf32, #tpu.memory_space<vmem>>, vector<8x128xf32>
    %1 = arith.mulf %0, %0 : vector<8x128xf32>
    %cst = arith.constant dense<0.000000e+00> : vector<8xf32>
    %2 = vector.multi_reduction <add>, %1, %cst [1] : vector<8x128xf32> to vector<8xf32>
    %3 = vector.shape_cast %2 : vector<8xf32> to vector<8x1xf32>
    %cst_1 = arith.constant 1.000000e-24 : f32
    %4 = vector.broadcast %cst_1 : f32 to vector<8x1xf32>
    %5 = arith.maximumf %3, %4 : vector<8x1xf32>
    %6 = math.rsqrt %5 : vector<8x1xf32>
    %7 = vector.broadcast %6 : vector<8x1xf32> to vector<8x128xf32>
    %8 = arith.mulf %0, %7 : vector<8x128xf32>
    %c0_2 = arith.constant 0 : index
    %c0_3 = arith.constant 0 : index
    %9 = vector.load %arg3[%c0_2, %c0_3] : memref<128x256xf32, #tpu.memory_space<vmem>>, vector<128x256xf32>
    %10 = arith.mulf %9, %9 : vector<128x256xf32>
    %cst_4 = arith.constant dense<0.000000e+00> : vector<256xf32>
    %11 = vector.multi_reduction <add>, %10, %cst_4 [0] : vector<128x256xf32> to vector<256xf32>
    %12 = vector.shape_cast %11 : vector<256xf32> to vector<1x256xf32>
    %cst_5 = arith.constant 1.000000e-24 : f32
    %13 = vector.broadcast %cst_5 : f32 to vector<1x256xf32>
    %14 = arith.maximumf %12, %13 : vector<1x256xf32>
    %15 = math.rsqrt %14 : vector<1x256xf32>
    %cst_6 = arith.constant dense<0.000000e+00> : vector<8x256xf32>
    %16 = tpu.matmul %8, %9, %cst_6 {dimension_numbers = #tpu.dot_dimension_numbers<[1], [0], [0], [1], [0, 0, 1, 1], [], []>} : vector<8x128xf32>, vector<128x256xf32>, vector<8x256xf32> -> vector<8x256xf32>
    %17 = vector.broadcast %15 : vector<1x256xf32> to vector<8x256xf32>
    %18 = arith.mulf %16, %17 : vector<8x256xf32>
    %19 = arith.mulf %18, %18 : vector<8x256xf32>
    %cst_7 = arith.constant 1.000000e+00 : f32
    %20 = vector.broadcast %cst_7 : f32 to vector<8x256xf32>
    %21 = arith.subf %20, %19 : vector<8x256xf32>
    %cst_8 = arith.constant 0.000000e+00 : f32
    %22 = vector.broadcast %cst_8 : f32 to vector<8x256xf32>
    %23 = arith.maximumf %21, %22 : vector<8x256xf32>
    %24 = math.sqrt %23 : vector<8x256xf32>
    %cst_9 = arith.constant 0.87758255 : f32
    %25 = vector.broadcast %cst_9 : f32 to vector<8x256xf32>
    %26 = arith.mulf %18, %25 : vector<8x256xf32>
    %cst_10 = arith.constant 0.47942555 : f32
    %27 = vector.broadcast %cst_10 : f32 to vector<8x256xf32>
    %28 = arith.mulf %24, %27 : vector<8x256xf32>
    %29 = arith.subf %26, %28 : vector<8x256xf32>
    %cst_11 = arith.constant -0.87758255 : f32
    %30 = vector.broadcast %cst_11 : f32 to vector<8x256xf32>
    %31 = arith.subf %18, %30 : vector<8x256xf32>
    %cst_12 = arith.constant 0.000000e+00 : f32
    %32 = vector.broadcast %cst_12 : f32 to vector<8x256xf32>
    %33 = arith.cmpf ogt, %31, %32 : vector<8x256xf32>
    %cst_13 = arith.constant 0.239712775 : f32
    %34 = vector.broadcast %cst_13 : f32 to vector<8x256xf32>
    %35 = arith.subf %18, %34 : vector<8x256xf32>
    %36 = arith.select %33, %29, %35 : vector<8x256xi1>, vector<8x256xf32>
    %37 = tpu.iota {dimensions = array<i32: 1>} : vector<8x256xi32>
    %c0_14 = arith.constant 0 : index
    %c0_15 = arith.constant 0 : index
    %38 = vector.load %arg1[%c0_14, %c0_15] : memref<8x1xi32, #tpu.memory_space<vmem>>, vector<8x1xi32>
    %39 = vector.broadcast %38 : vector<8x1xi32> to vector<8x256xi32>
    %40 = arith.cmpi eq, %37, %39 : vector<8x256xi32>
    %41 = arith.select %40, %36, %18 : vector<8x256xi1>, vector<8x256xf32>
    %cst_16 = arith.constant 19.4331341 : f32
    %42 = vector.broadcast %cst_16 : f32 to vector<8x256xf32>
    %43 = arith.mulf %41, %42 : vector<8x256xf32>
    %c0_17 = arith.constant 0 : index
    %c0_18 = arith.constant 0 : index
    %44 = vector.load %arg4[%c0_17, %c0_18] : memref<8x256xf32, #tpu.memory_space<vmem>>, vector<8x256xf32>
    tpu.vector_store %arg4[%c0_17, %c0_18], %43 {strides = array<i32>} : memref<8x256xf32, #tpu.memory_space<vmem>>, vector<8x256xf32>,
    %cst_19 = arith.constant dense<0.000000e+00> : vector<8x8xf32>
    %45 = tpu.matmul %8, %8, %cst_19 {dimension_numbers = #tpu.dot_dimension_numbers<[1], [1], [0], [0], [0, 0, 1, 0], [], []>} : vector<8x128xf32>, vector<8x128xf32>, vector<8x8xf32> -> vector<8x8xf32>
    %c0_20 = arith.constant 0 : index
    %c0_21 = arith.constant 0 : index
    %46 = vector.load %arg5[%c0_20, %c0_21] : memref<8x8xf32, #tpu.memory_space<vmem>>, vector<8x8xf32>
    tpu.vector_store %arg5[%c0_20, %c0_21], %45 {strides = array<i32>} : memref<8x8xf32, #tpu.memory_space<vmem>>, vector<8x8xf32>,
    return
  }
  func.func @transform_0(%arg0: i32) -> (i32, i32) {
    %c0_i32 = arith.constant 0 : i32
    %c0_i32_0 = arith.constant 0 : i32
    %c0_i32_1 = arith.constant 0 : i32
    return %c0_i32, %c0_i32_0 : i32, i32
  }
  func.func @transform_1(%arg0: i32) -> (i32, i32) {
    %c0_i32 = arith.constant 0 : i32
    %c0_i32_0 = arith.constant 0 : i32
    %c0_i32_1 = arith.constant 0 : i32
    return %c0_i32, %c0_i32_0 : i32, i32
  }
  func.func @transform_2(%arg0: i32) -> (i32, i32) {
    %c0_i32 = arith.constant 0 : i32
    %c0_i32_0 = arith.constant 0 : i32
    %c0_i32_1 = arith.constant 0 : i32
    return %c0_i32, %c0_i32_0 : i32, i32
  }
  func.func @transform_3(%arg0: i32) -> (i32, i32) {
    %c0_i32 = arith.constant 0 : i32
    %c0_i32_0 = arith.constant 0 : i32
    %c0_i32_1 = arith.constant 0 : i32
    return %c0_i32, %c0_i32_0 : i32, i32
  }
  func.func @transform_4(%arg0: i32) -> (i32, i32) {
    %c0_i32 = arith.constant 0 : i32
    %c0_i32_0 = arith.constant 0 : i32
    %c0_i32_1 = arith.constant 0 : i32
    return %c0_i32, %c0_i32_0 : i32, i32
  }
}

</mosaic_0001>

<llo_original>
// kernel: tpu_custom_call.1
$region0: #{tpu_custom_call.1}
  #allocation0 [shape = 'u32[]', space=smem, size = 0x4, offset = 0x4, fixed_abs, tag = 'smem constant byte address 0x4 - core index']
  #allocation1 [shape = 'u32[144,128]{1,0:T(1,128)}', space=vmem, size = 0x12000, scoped, tag = 'internal scratch']
  %s0 = inlined_call_operand.vmem [shape: s32[8,1], index: 0, kind: input, shape index: {}]
  %s1 = inlined_call_operand.vmem [shape: f32[8,128], index: 1, kind: input, shape index: {}]
  %s2 = inlined_call_operand.hbm [shape: f32[128,256], index: 2, kind: input, shape index: {}]
  %s3 = inlined_call_operand.hbm [shape: f32[8,256], index: 3, kind: output, shape index: {0}]
  %s4 = inlined_call_operand.hbm [shape: f32[8,8], index: 4, kind: output, shape index: {1}]
  %5 = xla_tuple %s3, %s4
  %s6 = sld [smem:[#allocation0]]
  $region34: #{tpu_custom_call.1} parent=0
    _
  %s8 = ssub.s32 1, %s6
  %s9 = scalar_select 0, %s8, %s6
  $region1: #{tpu_custom_call.1} parent=0
    #allocation2 [shape = 'u8[131072]{0}', space=vmem, size = 0x20000, scoped, tag = 'input window, operand 2, single buffered']
    #allocation3 [shape = 's32[1]{0}', space=sflag, size = 0x4, scoped, tag = 'scoped memory for tpu_custom_call.1']
    #allocation4 [shape = 's32[1]{0}', space=sflag, size = 0x4, scoped, tag = 'scoped memory for tpu_custom_call.1']
    #allocation5 [shape = 'u8[8192]{0}', space=vmem, size = 0x2000, scoped, tag = 'output window, operand 0, single buffered']
    #allocation6 [shape = 'u8[4096]{0}', space=vmem, size = 0x1000, scoped, tag = 'output window, operand 1, single buffered']
    #allocation7 [shape = 's32[1]{0}', space=sflag, size = 0x4, scoped, tag = 'scoped memory for tpu_custom_call.1']
    %10 = vsyncpa [#allocation3], 0
    %11 = vsyncpa [#allocation4], 0
    %12 = vsyncpa [#allocation7], 0
    // Predicated region
    $region2: #{tpu_custom_call.1} parent=1 // pred_check
      _
    $region3: #{tpu_custom_call.1} parent=1 // pred_check_branch
      %14 = sbr.rel (0) target = $region5
    $region4: #{tpu_custom_call.1} parent=1 // pred_region
      _
    $region5: #{tpu_custom_call.1} parent=1 // pred_fallthru
      _
    // Predicated region
    $region6: #{tpu_custom_call.1} parent=1 // pred_check
      _
    $region7: #{tpu_custom_call.1} parent=1 // pred_check_branch
      %16 = sbr.rel (0) target = $region9
    $region8: #{tpu_custom_call.1} parent=1 // pred_region
      _
    $region9: #{tpu_custom_call.1} parent=1 // pred_fallthru
      _
    // Predicated region
    $region10: #{tpu_custom_call.1} parent=1 // pred_check
      _
    $region11: #{tpu_custom_call.1} parent=1 // pred_check_branch
      %18 = sbr.rel (0) target = $region13
    $region12: #{tpu_custom_call.1} parent=1 // pred_region
      %s20 = ssub.s32 4096, 4096
      %21 = vsyncadd [#allocation3], %s20
      %s22 = sshll.u32 [#allocation2], 4
      %s23 = int_to_ptr.vmem [resolvable:$true] %s22
      %28 = dma.hbm_to_vmem [thread:$0]  %s2, 4096, %s23, [#allocation3], 256, 256, 16
    $region13: #{tpu_custom_call.1} parent=1 // pred_fallthru
      _
    // Predicated region
    $region14: #{tpu_custom_call.1} parent=1 // pred_check
      _
    $region15: #{tpu_custom_call.1} parent=1 // pred_check_branch
      %30 = sbr.rel (0) target = $region17
    $region16: #{tpu_custom_call.1} parent=1 // pred_region
      %31 = dma.done [#allocation3], 4096
    $region17: #{tpu_custom_call.1} parent=1 // pred_fallthru
      _
    %v32 = vld [vmem:[%s1] sm:$0xff]
    %v33 = vmul.f32 %v32, %v32
    %34 = vadd.xlane.f32.xlu0 %v33
    %v35 = vpop.xlane.xlu0 %34
    %v36 = vmax.f32 %v35, 1e-24
    %v37 = vrsqrt.pop %v36
    %v38 = vmul.f32 %v32, %v37
    %v39 = vld [vmem:[#allocation2] sm:$0xff]
    %v40 = vld [vmem:[#allocation2 + $0x8] sm:$0xff]
    %v41 = vld [vmem:[#allocation2 + $0x10] sm:$0xff]
    %v42 = vld [vmem:[#allocation2 + $0x18] sm:$0xff]
    %v43 = vld [vmem:[#allocation2 + $0x20] sm:$0xff]
    %v44 = vld [vmem:[#allocation2 + $0x28] sm:$0xff]
    %v45 = vld [vmem:[#allocation2 + $0x30] sm:$0xff]
    %v46 = vld [vmem:[#allocation2 + $0x38] sm:$0xff]
    %v47 = vld [vmem:[#allocation2 + $0x40] sm:$0xff]
    %v48 = vld [vmem:[#allocation2 + $0x48] sm:$0xff]
    %v49 = vld [vmem:[#allocation2 + $0x50] sm:$0xff]
    %v50 = vld [vmem:[#allocation2 + $0x58] sm:$0xff]
    %v51 = vld [vmem:[#allocation2 + $0x60] sm:$0xff]
    %v52 = vld [vmem:[#allocation2 + $0x68] sm:$0xff]
    %v53 = vld [vmem:[#allocation2 + $0x70] sm:$0xff]
    %v54 = vld [vmem:[#allocation2 + $0x78] sm:$0xff]
    %v55 = vld [vmem:[#allocation2 + $0x80] sm:$0xff]
    %v56 = vld [vmem:[#allocation2 + $0x88] sm:$0xff]
    %v57 = vld [vmem:[#allocation2 + $0x90] sm:$0xff]
    %v58 = vld [vmem:[#allocation2 + $0x98] sm:$0xff]
    %v59 = vld [vmem:[#allocation2 + $0xa0] sm:$0xff]
    %v60 = vld [vmem:[#allocation2 + $0xa8] sm:$0xff]
    %v61 = vld [vmem:[#allocation2 + $0xb0] sm:$0xff]
    %v62 = vld [vmem:[#allocation2 + $0xb8] sm:$0xff]
    %v63 = vld [vmem:[#allocation2 + $0xc0] sm:$0xff]
    %v64 = vld [vmem:[#allocation2 + $0xc8] sm:$0xff]
    %v65 = vld [vmem:[#allocation2 + $0xd0] sm:$0xff]
    %v66 = vld [vmem:[#allocation2 + $0xd8] sm:$0xff]
    %v67 = vld [vmem:[#allocation2 + $0xe0] sm:$0xff]
    %v68 = vld [vmem:[#allocation2 + $0xe8] sm:$0xff]
    %v69 = vld [vmem:[#allocation2 + $0xf0] sm:$0xff]
    %v70 = vld [vmem:[#allocation2 + $0xf8] sm:$0xff]
    %v71 = vmul.f32 %v39, %v39
    %v72 = vmul.f32 %v40, %v40
    %v73 = vmul.f32 %v41, %v41
    %v74 = vmul.f32 %v42, %v42
    %v75 = vmul.f32 %v43, %v43
    %v76 = vmul.f32 %v44, %v44
    %v77 = vmul.f32 %v45, %v45
    %v78 = vmul.f32 %v46, %v46
    %v79 = vmul.f32 %v47, %v47
    %v80 = vmul.f32 %v48, %v48
    %v81 = vmul.f32 %v49, %v49
    %v82 = vmul.f32 %v50, %v50
    %v83 = vmul.f32 %v51, %v51
    %v84 = vmul.f32 %v52, %v52
    %v85 = vmul.f32 %v53, %v53
    %v86 = vmul.f32 %v54, %v54
    %v87 = vmul.f32 %v55, %v55
    %v88 = vmul.f32 %v56, %v56
    %v89 = vmul.f32 %v57, %v57
    %v90 = vmul.f32 %v58, %v58
    %v91 = vmul.f32 %v59, %v59
    %v92 = vmul.f32 %v60, %v60
    %v93 = vmul.f32 %v61, %v61
    %v94 = vmul.f32 %v62, %v62
    %v95 = vmul.f32 %v63, %v63
    %v96 = vmul.f32 %v64, %v64
    %v97 = vmul.f32 %v65, %v65
    %v98 = vmul.f32 %v66, %v66
    %v99 = vmul.f32 %v67, %v67
    %v100 = vmul.f32 %v68, %v68
    %v101 = vmul.f32 %v69, %v69
    %v102 = vmul.f32 %v70, %v70
    %v103 = vadd.f32 %v71, %v73
    %v104 = vadd.f32 %v103, %v75
    %v105 = vadd.f32 %v104, %v77
    %v106 = vadd.f32 %v105, %v79
    %v107 = vadd.f32 %v106, %v81
    %v108 = vadd.f32 %v107, %v83
    %v109 = vadd.f32 %v108, %v85
    %v110 = vadd.f32 %v109, %v87
    %v111 = vadd.f32 %v110, %v89
    %v112 = vadd.f32 %v111, %v91
    %v113 = vadd.f32 %v112, %v93
    %v114 = vadd.f32 %v113, %v95
    %v115 = vadd.f32 %v114, %v97
    %v116 = vadd.f32 %v115, %v99
    %v117 = vadd.f32 %v116, %v101
    %v118 = vrot.slane %v117, 4
    %v119 = vadd.f32 %v117, %v118
    %v120 = vrot.slane %v119, 2
    %v121 = vadd.f32 %v119, %v120
    %v122 = vrot.slane %v121, 1
    %v123 = vadd.f32 %v121, %v122
    %v124 = vadd.f32 %v72, %v74
    %v125 = vadd.f32 %v124, %v76
    %v126 = vadd.f32 %v125, %v78
    %v127 = vadd.f32 %v126, %v80
    %v128 = vadd.f32 %v127, %v82
    %v129 = vadd.f32 %v128, %v84
    %v130 = vadd.f32 %v129, %v86
    %v131 = vadd.f32 %v130, %v88
    %v132 = vadd.f32 %v131, %v90
    %v133 = vadd.f32 %v132, %v92
    %v134 = vadd.f32 %v133, %v94
    %v135 = vadd.f32 %v134, %v96
    %v136 = vadd.f32 %v135, %v98
    %v137 = vadd.f32 %v136, %v100
    %v138 = vadd.f32 %v137, %v102
    %v139 = vrot.slane %v138, 4
    %v140 = vadd.f32 %v138, %v139
    %v141 = vrot.slane %v140, 2
    %v142 = vadd.f32 %v140, %v141
    %v143 = vrot.slane %v142, 1
    %v144 = vadd.f32 %v142, %v143
    %v145 = vmax.f32 %v123, 1e-24
    %v146 = vmax.f32 %v144, 1e-24
    %v147 = vrsqrt.pop %v145
    %v148 = vrsqrt.pop %v146
    %149 = vmatprep.subr.mxu0 %v40
    %150 = vmatpush1.msra.mxu0 %v39
    %151 = vmatprep.subr.mxu0 %v42
    %152 = vmatpush1.msra.mxu0 %v41
    %153 = vmatprep.subr.mxu0 %v44
    %154 = vmatpush1.msra.mxu0 %v43
    %155 = vmatprep.subr.mxu0 %v46
    %156 = vmatpush1.msra.mxu0 %v45
    %157 = vmatprep.subr.mxu0 %v48
    %158 = vmatpush1.msra.mxu0 %v47
    %159 = vmatprep.subr.mxu0 %v50
    %160 = vmatpush1.msra.mxu0 %v49
    %161 = vmatprep.subr.mxu0 %v52
    %162 = vmatpush1.msra.mxu0 %v51
    %163 = vmatprep.subr.mxu0 %v54
    %164 = vmatpush1.msra.mxu0 %v53
    %165 = vmatprep.subr.mxu0 %v56
    %166 = vmatpush1.msra.mxu0 %v55
    %167 = vmatprep.subr.mxu0 %v58
    %168 = vmatpush1.msra.mxu0 %v57
    %169 = vmatprep.subr.mxu0 %v60
    %170 = vmatpush1.msra.mxu0 %v59
    %171 = vmatprep.subr.mxu0 %v62
    %172 = vmatpush1.msra.mxu0 %v61
    %173 = vmatprep.subr.mxu0 %v64
    %174 = vmatpush1.msra.mxu0 %v63
    %175 = vmatprep.subr.mxu0 %v66
    %176 = vmatpush1.msra.mxu0 %v65
    %177 = vmatprep.subr.mxu0 %v68
    %178 = vmatpush1.msra.mxu0 %v67
    %179 = vmatprep.subr.mxu0 %v70
    %180 = vmatpush1.msra.mxu0 %v69
    %181 = vmatprep.subr.mxu0 0.0
    %182 = vmatpush1.msra.mxu0 0.0
    %183 = vmatprep.subr.mxu0 0.0
    %184 = vmatpush1.msra.mxu0 0.0
    %185 = vmatprep.subr.mxu0 0.0
    %186 = vmatpush1.msra.mxu0 0.0
    %187 = vmatprep.subr.mxu0 0.0
    %188 = vmatpush1.msra.mxu0 0.0
    %189 = vmatprep.subr.mxu0 0.0
    %190 = vmatpush1.msra.mxu0 0.0
    %191 = vmatprep.subr.mxu0 0.0
    %192 = vmatpush1.msra.mxu0 0.0
    %193 = vmatprep.subr.mxu0 0.0
    %194 = vmatpush1.msra.mxu0 0.0
    %195 = vmatprep.subr.mxu0 0.0
    %196 = vmatpush1.msra.mxu0 0.0
    %197 = vmatprep.subr.mxu0 0.0
    %198 = vmatpush1.msra.mxu0 0.0
    %199 = vmatprep.subr.mxu0 0.0
    %200 = vmatpush1.msra.mxu0 0.0
    %201 = vmatprep.subr.mxu0 0.0
    %202 = vmatpush1.msra.mxu0 0.0
    %203 = vmatprep.subr.mxu0 0.0
    %204 = vmatpush1.msra.mxu0 0.0
    %205 = vmatprep.subr.mxu0 0.0
    %206 = vmatpush1.msra.mxu0 0.0
    %207 = vmatprep.subr.mxu0 0.0
    %208 = vmatpush1.msra.mxu0 0.0
    %209 = vmatprep.subr.mxu0 0.0
    %210 = vmatpush1.msra.mxu0 0.0
    %211 = vmatprep.subr.mxu0 0.0
    %212 = vmatpush1.msra.mxu0 0.0
    %213 = vmatprep.mubr.f32.mxu0 0.0
    %214 = vmatmul.mubr.f32.gmra.mrb[0].mxu0 %v38
    %v215 = vpop.f32.mrb[0].mxu0
    %v216 = vadd.f32 0.0, %v215
    %v217 = vpop.f32.mrb[0].mxu0
    %v218 = vadd.f32 0.0, %v217
    %219 = vdwg.mxu0
    %v220 = vmul.f32 %v216, %v147
    %v221 = vmul.f32 %v218, %v148
    %v222 = vmul.f32 %v220, %v220
    %v223 = vmul.f32 %v221, %v221
    %v224 = vsub.f32 1.0, %v222
    %v225 = vsub.f32 1.0, %v223
    %v226 = vmax.f32 %v224, 0.0
    %v227 = vmax.f32 %v225, 0.0
    %v228 = vrsqrt.pop %v226
    %v229 = vmul.f32 %v226, %v228
    %vm230 = vcmp.eq.f32.partialorder %v226, inf
    %v231 = vsel %vm230, %v226, %v229
    %vm232 = vcmp.eq.f32.partialorder %v226, 0.0
    %v233 = vand.u32 %v226, 2147483648
    %v234 = vsel %vm232, %v233, %v231
    %v235 = vrsqrt.pop %v227
    %v236 = vmul.f32 %v227, %v235
    %vm237 = vcmp.eq.f32.partialorder %v227, inf
    %v238 = vsel %vm237, %v227, %v236
    %vm239 = vcmp.eq.f32.partialorder %v227, 0.0
    %v240 = vand.u32 %v227, 2147483648
    %v241 = vsel %vm239, %v240, %v238
    %v242 = vmul.f32 %v220, 0.87758255
    %v243 = vmul.f32 %v221, 0.87758255
    %v244 = vmul.f32 %v234, 0.47942555
    %v245 = vmul.f32 %v241, 0.47942555
    %v246 = vsub.f32 %v242, %v244
    %v247 = vsub.f32 %v243, %v245
    %v248 = vsub.f32 %v220, -0.87758255
    %v249 = vsub.f32 %v221, -0.87758255
    %vm250 = vcmp.gt.f32.partialorder %v248, 0.0
    %vm251 = vcmp.gt.f32.partialorder %v249, 0.0
    %v252 = vsub.f32 %v220, 0.23971277
    %v253 = vsub.f32 %v221, 0.23971277
    %v254 = vsel %vm250, %v246, %v252
    %v255 = vsel %vm251, %v247, %v253
    %v256 = vlaneseq
    %v257 = vand.u32 %v256, 127
    %v258 = vadd.s32 %v257, 128
    %v259 = vld [vmem:[%s0] sm:$0xff]
    %260 = vset.pattern.permute.xlu0 0
    %261 = vperm.xlu0 %260, %v259
    %v262 = vpop.permute.xlu0 %261
    %vm263 = vcmp.eq.s32.totalorder %v257, %v262
    %vm264 = vcmp.eq.s32.totalorder %v258, %v262
    %v265 = vsel %vm263, %v254, %v220
    %v266 = vsel %vm264, %v255, %v221
    %v267 = vmul.f32 %v265, 19.433134
    %v268 = vmul.f32 %v266, 19.433134
    %269 = vst [vmem:[#allocation5] sm:$0xff] %v267
    %270 = vst [vmem:[#allocation5 + $0x8] sm:$0xff] %v268
    %271 = vmatprep.subr.mxu0 0.0
    %272 = vmatpush1.xpose.msra.mxu0 %v38
    %273 = vmatprep.subr.mxu0 0.0
    %274 = vmatpush1.xpose.msra.mxu0 0.0
    %275 = vmatprep.subr.mxu0 0.0
    %276 = vmatpush1.xpose.msra.mxu0 0.0
    %277 = vmatprep.subr.mxu0 0.0
    %278 = vmatpush1.xpose.msra.mxu0 0.0
    %279 = vmatprep.subr.mxu0 0.0
    %280 = vmatpush1.xpose.msra.mxu0 0.0
    %281 = vmatprep.subr.mxu0 0.0
    %282 = vmatpush1.xpose.msra.mxu0 0.0
    %283 = vmatprep.subr.mxu0 0.0
    %284 = vmatpush1.xpose.msra.mxu0 0.0
    %285 = vmatprep.subr.mxu0 0.0
    %286 = vmatpush1.xpose.msra.mxu0 0.0
    %287 = vmatprep.subr.mxu0 0.0
    %288 = vmatpush1.xpose.msra.mxu0 0.0
    %289 = vmatprep.subr.mxu0 0.0
    %290 = vmatpush1.xpose.msra.mxu0 0.0
    %291 = vmatprep.subr.mxu0 0.0
    %292 = vmatpush1.xpose.msra.mxu0 0.0
    %293 = vmatprep.subr.mxu0 0.0
    %294 = vmatpush1.xpose.msra.mxu0 0.0
    %295 = vmatprep.subr.mxu0 0.0
    %296 = vmatpush1.xpose.msra.mxu0 0.0
    %297 = vmatprep.subr.mxu0 0.0
    %298 = vmatpush1.xpose.msra.mxu0 0.0
    %299 = vmatprep.subr.mxu0 0.0
    %300 = vmatpush1.xpose.msra.mxu0 0.0
    %301 = vmatprep.subr.mxu0 0.0
    %302 = vmatpush1.xpose.msra.mxu0 0.0
    %303 = vmatprep.subr.mxu0 0.0
    %304 = vmatpush1.xpose.msra.mxu0 0.0
    %305 = vmatprep.subr.mxu0 0.0
    %306 = vmatpush1.xpose.msra.mxu0 0.0
    %307 = vmatprep.subr.mxu0 0.0
    %308 = vmatpush1.xpose.msra.mxu0 0.0
    %309 = vmatprep.subr.mxu0 0.0
    %310 = vmatpush1.xpose.msra.mxu0 0.0
    %311 = vmatprep.subr.mxu0 0.0
    %312 = vmatpush1.xpose.msra.mxu0 0.0
    %313 = vmatprep.subr.mxu0 0.0
    %314 = vmatpush1.xpose.msra.mxu0 0.0
    %315 = vmatprep.subr.mxu0 0.0
    %316 = vmatpush1.xpose.msra.mxu0 0.0
    %317 = vmatprep.subr.mxu0 0.0
    %318 = vmatpush1.xpose.msra.mxu0 0.0
    %319 = vmatprep.subr.mxu0 0.0
    %320 = vmatpush1.xpose.msra.mxu0 0.0
    %321 = vmatprep.subr.mxu0 0.0
    %322 = vmatpush1.xpose.msra.mxu0 0.0
    %323 = vmatprep.subr.mxu0 0.0
    %324 = vmatpush1.xpose.msra.mxu0 0.0
    %325 = vmatprep.subr.mxu0 0.0
    %326 = vmatpush1.xpose.msra.mxu0 0.0
    %327 = vmatprep.subr.mxu0 0.0
    %328 = vmatpush1.xpose.msra.mxu0 0.0
    %329 = vmatprep.subr.mxu0 0.0
    %330 = vmatpush1.xpose.msra.mxu0 0.0
    %331 = vmatprep.subr.mxu0 0.0
    %332 = vmatpush1.xpose.msra.mxu0 0.0
    %333 = vmatprep.subr.mxu0 0.0
    %334 = vmatpush1.xpose.msra.mxu0 0.0
    %335 = vmatprep.mubr.f32.mxu0 0.0
    %336 = vmatmul.mubr.f32.gmra.mrb[0].mxu0 %v38
    %v337 = vpop.f32.mrb[0].mxu0
    %v338 = vadd.f32 0.0, %v337
    %v339 = vpop.f32.mrb[0].mxu0
    %340 = vdwg.mxu0
    %vm341 = vcmask 64512
    %342 = vst.msk [vmem:[#allocation6] sm:$0xff] %vm341, %v338
    // Predicated region
    $region18: #{tpu_custom_call.1} parent=1 // pred_check
      _
    $region19: #{tpu_custom_call.1} parent=1 // pred_check_branch
      %344 = sbr.rel (0) target = $region21
    $region20: #{tpu_custom_call.1} parent=1 // pred_region
      %s346 = ssub.s32 256, 256
      %347 = vsyncadd [#allocation4], %s346
      %s349 = sshll.u32 [#allocation5], 4
      %s350 = int_to_ptr.vmem [resolvable:$true] %s349
      %352 = dma.vmem_to_hbm [thread:$0]  %s350, 256, %s3, [#allocation4]
    $region21: #{tpu_custom_call.1} parent=1 // pred_fallthru
      _
    // Predicated region
    $region22: #{tpu_custom_call.1} parent=1 // pred_check
      _
    $region23: #{tpu_custom_call.1} parent=1 // pred_check_branch
      %354 = sbr.rel (0) target = $region25
    $region24: #{tpu_custom_call.1} parent=1 // pred_region
      %s356 = ssub.s32 128, 128
      %357 = vsyncadd [#allocation7], %s356
      %s359 = sshll.u32 [#allocation6], 4
      %s360 = int_to_ptr.vmem [resolvable:$true] %s359
      %362 = dma.vmem_to_hbm [thread:$0]  %s360, 128, %s4, [#allocation7]
    $region25: #{tpu_custom_call.1} parent=1 // pred_fallthru
      _
    // Predicated region
    $region26: #{tpu_custom_call.1} parent=1 // pred_check
      _
    $region27: #{tpu_custom_call.1} parent=1 // pred_check_branch
      %364 = sbr.rel (0) target = $region29
    $region28: #{tpu_custom_call.1} parent=1 // pred_region
      %365 = dma.done [#allocation4], 256
    $region29: #{tpu_custom_call.1} parent=1 // pred_fallthru
      _
    // Predicated region
    $region30: #{tpu_custom_call.1} parent=1 // pred_check
      _
    $region31: #{tpu_custom_call.1} parent=1 // pred_check_branch
      %367 = sbr.rel (0) target = $region33
    $region32: #{tpu_custom_call.1} parent=1 // pred_region
      %368 = dma.done [#allocation7], 128
    $region33: #{tpu_custom_call.1} parent=1 // pred_fallthru
      _
    %369 = vsyncpa [#allocation3], 1
    %370 = vsyncpa [#allocation4], 1
    %371 = vsyncpa [#allocation7], 1

</llo_original>
